<compile_context>
chip_gen: v7x
topology: tpu7x:2x2x1
jax: 0.10.0
libtpu: 0.0.40
codegen_flags: <defaults>
</compile_context>

<pallas_src>
import functools

import jax
import jax.numpy as jnp
from jax.experimental import pallas as pl
from jax.experimental.pallas import tpu as pltpu

BN_EPS = 1e-5
TB_MAX = 4096          # max batch rows per grid step (well under scoped VMEM on all gens)


# --------------------------------------------------------------------------- #
# Kernel
# --------------------------------------------------------------------------- #
def _imu_kernel(D, H, x_ref, w_ref, b_ref, out_ref):
    H2, H4, H6, Hh = 2 * H, 4 * H, 6 * H, H // 2
    b = b_ref[...]                                   # (8, 6H) f32 bias slab

    def bidi_lstm(inp_bf16, w_bf16, bias):
        # Fused bidirectional cell step; gate columns [i_f | i_r | o_f | o_r | g_f | g_r].
        # bf16 operands -> single MXU pass; f32 accumulation + f32 elementwise
        # (v5e has no bf16 VPU/EUP, so elementwise must be f32 there anyway).
        gates = jnp.dot(inp_bf16, w_bf16, preferred_element_type=jnp.float32) + bias
        sig = jax.nn.sigmoid(gates[:, :H4])          # i and o on one contiguous 4H slab
        g = jnp.tanh(gates[:, H4:H6])
        i, o = sig[:, :H2], sig[:, H2:H4]
        # c0 = h0 = 0  =>  forget gate and W_hh term are dead:  c = i*g
        return o * jnp.tanh(i * g)                   # (TB, 2H) f32, already [h_fwd | h_rev]

    # Padded rows of a partial last tile compute on uninitialized VMEM; the
    # results are discarded by the writeback, so output stays correct.
    x = x_ref[...].astype(jnp.bfloat16)
    h0 = bidi_lstm(x, w_ref[0:D, :], b[0:1, :])                              # layer 0
    h1 = bidi_lstm(h0.astype(jnp.bfloat16), w_ref[D:D + H2, :], b[1:2, :])   # layer 1

    r0 = D + H2          # fw1 (BN folded in), pre-transposed (2H, H)
    r1 = r0 + H2         # fw2, pre-transposed (H, H/2)
    r2 = r1 + H          # fw3, pre-transposed (H/2, 1)

    # BatchNorm1d(eval) pre-folded into fw1/fb1; Dropout = identity in eval mode.
    z1 = jax.nn.silu(
        jnp.dot(h1.astype(jnp.bfloat16), w_ref[r0:r1, :H],
                preferred_element_type=jnp.float32) + b[2:3, :H])
    z2 = jax.nn.silu(
        jnp.dot(z1.astype(jnp.bfloat16), w_ref[r1:r2, :Hh],
                preferred_element_type=jnp.float32) + b[3:4, :Hh])
    out_ref[...] = (
        jnp.dot(z2.astype(jnp.bfloat16), w_ref[r2:r2 + Hh, :1],
                preferred_element_type=jnp.float32) + b[4:5, :1])


def _round_up(n, m):
    return ((n + m - 1) // m) * m


def _choose_tb(batch, tb_max=TB_MAX):
    # Even number of grid steps whenever the batch must be split, so both v7x
    # TensorCores get work under dimension_semantics=("parallel",). For tiny
    # batches this collapses to a single (<= 8-row) tile; on single-TC chips
    # (v5e/v6e) the extra grid step costs ~0.35 us, which is noise.
    num_tiles = 2 * pl.cdiv(batch, 2 * tb_max)
    return min(_round_up(pl.cdiv(batch, num_tiles), 8), tb_max)


def imu_forward_pallas(x, w_slab, b_slab, input_dim, hidden_size, tb=None):
    batch = x.shape[0]
    if tb is None:
        tb = _choose_tb(batch)
    kernel = functools.partial(_imu_kernel, input_dim, hidden_size)
    return pl.pallas_call(
        kernel,
        out_shape=jax.ShapeDtypeStruct((batch, 1), jnp.float32),
        grid=(pl.cdiv(batch, tb),),
        in_specs=[
            pl.BlockSpec((tb, input_dim), lambda i: (i, 0)),     # x tiles stream (double-buffered)
            pl.BlockSpec(w_slab.shape, lambda i: (0, 0)),        # bf16 weight slab, VMEM-resident
            pl.BlockSpec(b_slab.shape, lambda i: (0, 0)),        # f32 bias slab, VMEM-resident
        ],
        out_specs=pl.BlockSpec((tb, 1), lambda i: (i, 0)),
        compiler_params=pltpu.CompilerParams(
            dimension_semantics=("parallel",)),                  # shard grid across TCs on v7x
    )(x, w_slab, b_slab)


# --------------------------------------------------------------------------- #
# Host-side parameter generation (PyTorch layout) and packing
# --------------------------------------------------------------------------- #
def make_params(key, input_dim, hidden_size):
    H = hidden_size
    ks = list(jax.random.split(key, 24))
    k = 1.0 / jnp.sqrt(jnp.float32(H))

    def u(key, shape, scale=None):
        s = k if scale is None else scale
        return jax.random.uniform(key, shape, jnp.float32, -s, s)

    # LSTM layer 0 (input_dim -> H), fwd & reverse; combined bias b_ih + b_hh.
    w0f = u(ks[0], (4 * H, input_dim))
    b0f = (u(ks[1], (1, 4 * H)) + u(ks[2], (1, 4 * H)))
    w0r = u(ks[3], (4 * H, input_dim))
    b0r = (u(ks[4], (1, 4 * H)) + u(ks[5], (1, 4 * H)))
    # LSTM layer 1 (2H -> H), fwd & reverse.
    w1f = u(ks[6], (4 * H, 2 * H))
    b1f = (u(ks[7], (1, 4 * H)) + u(ks[8], (1, 4 * H)))
    w1r = u(ks[9], (4 * H, 2 * H))
    b1r = (u(ks[10], (1, 4 * H)) + u(ks[11], (1, 4 * H)))
    # BatchNorm1d(2H) running stats + affine.
    gamma = 1.0 + 0.1 * jax.random.normal(ks[12], (1, 2 * H), jnp.float32)
    beta = 0.1 * jax.random.normal(ks[13], (1, 2 * H), jnp.float32)
    mean = 0.1 * jax.random.normal(ks[14], (1, 2 * H), jnp.float32)
    var = jax.random.uniform(ks[15], (1, 2 * H), jnp.float32, 0.5, 1.5)
    # MLP head.
    fw1 = u(ks[16], (H, 2 * H), 1.0 / jnp.sqrt(jnp.float32(2 * H)))
    fb1 = u(ks[17], (1, H), 1.0 / jnp.sqrt(jnp.float32(2 * H)))
    fw2 = u(ks[18], (H // 2, H), 1.0 / jnp.sqrt(jnp.float32(H)))
    fb2 = u(ks[19], (1, H // 2), 1.0 / jnp.sqrt(jnp.float32(H)))
    fw3 = u(ks[20], (1, H // 2), 1.0 / jnp.sqrt(jnp.float32(H // 2)))
    fb3 = u(ks[21], (1, 1), 1.0 / jnp.sqrt(jnp.float32(H // 2)))
    return (w0f, b0f, w0r, b0r, w1f, b1f, w1r, b1r,
            gamma, beta, mean, var,
            fw1, fb1, fw2, fb2, fw3, fb3)


def pack_params(params, D, H):
    """Pre-transpose, fuse LSTM directions, drop dead f-gate, fold BN, build 2 slabs.

    Weight slab is returned in bfloat16 (single-pass MXU); bias slab stays f32
    (it is added after the f32-accumulating dot). Row offsets D, D+2H, +2H, +H
    are all multiples of 16 for the shapes used here, so bf16 sublane packing
    keeps every sliced region on a tile boundary.
    """
    (w0f, b0f, w0r, b0r, w1f, b1f, w1r, b1r,
     gamma, beta, mean, var, fw1, fb1, fw2, fb2, fw3, fb3) = params
    H2, H6, Hh = 2 * H, 6 * H, H // 2

    def pack_lstm(wf, wr, bf, br):
        # PyTorch gate row order in W_ih: [i | f | g | o]; f is dead (c0 == 0).
        # Packed column order (pre-transposed): [i_f | i_r | o_f | o_r | g_f | g_r].
        w = jnp.concatenate(
            [wf[0:H].T, wr[0:H].T,                    # i
             wf[3 * H:4 * H].T, wr[3 * H:4 * H].T,    # o
             wf[2 * H:3 * H].T, wr[2 * H:3 * H].T],   # g
            axis=1)
        b = jnp.concatenate(
            [bf[:, 0:H], br[:, 0:H],
             bf[:, 3 * H:4 * H], br[:, 3 * H:4 * H],
             bf[:, 2 * H:3 * H], br[:, 2 * H:3 * H]], axis=1)
        return w, b

    w0, b0 = pack_lstm(w0f, w0r, b0f, b0r)            # (D, 6H), (1, 6H)
    w1, b1 = pack_lstm(w1f, w1r, b1f, b1r)            # (2H, 6H), (1, 6H)

    # Fold BatchNorm1d(eval) into the first MLP Linear (in f32, then cast).
    s = gamma * jax.lax.rsqrt(var + BN_EPS)           # (1, 2H)
    t = beta - mean * s                               # (1, 2H)
    fw1_bn_T = fw1.T * s.reshape(H2, 1)               # (2H, H), pre-transposed
    fb1_bn = fb1 + t @ fw1.T                          # (1, H)

    rows = D + H2 + H2 + H + Hh
    RW = ((rows + 15) // 16) * 16                     # multiple of 16 for bf16 sublanes
    w_slab = jnp.zeros((RW, H6), jnp.float32)
    w_slab = w_slab.at[0:D, :].set(w0)
    w_slab = w_slab.at[D:D + H2, :].set(w1)
    r0 = D + H2
    w_slab = w_slab.at[r0:r0 + H2, 0:H].set(fw1_bn_T)
    r1 = r0 + H2
    w_slab = w_slab.at[r1:r1 + H, 0:Hh].set(fw2.T)
    r2 = r1 + H
    w_slab = w_slab.at[r2:r2 + Hh, 0:1].set(fw3.T)

    b_slab = jnp.zeros((8, H6), jnp.float32)
    b_slab = b_slab.at[0:1, :].set(b0)
    b_slab = b_slab.at[1:2, :].set(b1)
    b_slab = b_slab.at[2:3, 0:H].set(fb1_bn)
    b_slab = b_slab.at[3:4, 0:Hh].set(fb2)
    b_slab = b_slab.at[4:5, 0:1].set(fb3)
    return w_slab.astype(jnp.bfloat16), b_slab


# --------------------------------------------------------------------------- #
# Pure-JAX reference (original, unfolded f32 semantics)
# --------------------------------------------------------------------------- #
def imu_forward_ref(x, params, H):
    (w0f, b0f, w0r, b0r, w1f, b1f, w1r, b1r,
     gamma, beta, mean, var, fw1, fb1, fw2, fb2, fw3, fb3) = params

    def cell(inp, w, b):
        g = inp @ w.T + b
        i, f, gg, o = (jax.nn.sigmoid(g[:, :H]), jax.nn.sigmoid(g[:, H:2 * H]),
                       jnp.tanh(g[:, 2 * H:3 * H]), jax.nn.sigmoid(g[:, 3 * H:]))
        return o * jnp.tanh(i * gg)

    h0 = jnp.concatenate([cell(x, w0f, b0f), cell(x, w0r, b0r)], axis=-1)
    h1 = jnp.concatenate([cell(h0, w1f, b1f), cell(h0, w1r, b1r)], axis=-1)
    y = (h1 - mean) * jax.lax.rsqrt(var + BN_EPS) * gamma + beta
    z1 = jax.nn.silu(y @ fw1.T + fb1)
    z2 = jax.nn.silu(z1 @ fw2.T + fb2)
    return z2 @ fw3.T + fb3


if __name__ == "__main__":
    BATCH, INPUT_DIM, HIDDEN = 8, 16, 32

    key = jax.random.PRNGKey(0)
    kx, kp = jax.random.split(key)
    x = jax.random.normal(kx, (BATCH, INPUT_DIM), jnp.float32)
    params = make_params(kp, INPUT_DIM, HIDDEN)
    w_slab, b_slab = pack_params(params, INPUT_DIM, HIDDEN)

    out = imu_forward_pallas(x, w_slab, b_slab, INPUT_DIM, HIDDEN)
    out = jax.block_until_ready(out)

    ref = imu_forward_ref(x, params, HIDDEN)
    assert out.shape == (BATCH, 1), out.shape
    # bf16 weights/activations at the MXU + BN fold mean the kernel is no longer
    # bit-comparable to the f32 reference; 5e-2 on O(1) outputs still catches any
    # structural error (gate order, BN fold, packing) by a wide margin.
    assert jnp.allclose(out, ref, atol=5e-2, rtol=5e-2), (out, ref)
    print("KERNEL_OK")
</pallas_src>

<mosaic_0001>
module attributes {stable_mosaic.version = 11 : i64} {
  func.func @_imu_kernel(%arg0: i32, %arg1: memref<8x16xf32, #tpu.memory_space<vmem>>, %arg2: memref<192x192xbf16, #tpu.memory_space<vmem>>, %arg3: memref<8x192xf32, #tpu.memory_space<vmem>>, %arg4: memref<8x1xf32, #tpu.memory_space<vmem>>) attributes {dimension_semantics = [#tpu.dimension_semantics<parallel>], iteration_bounds = array<i64: 1>, scalar_prefetch = 0 : i64, scratch_operands = 0 : i64, tpu.core_type = #tpu.core_type<tc>, window_params = [{transform_indices = @transform_0, window_bounds = array<i64: 8, 16>}, {pipeline_mode = #tpu.pipeline_mode<synchronous>, transform_indices = @transform_1, window_bounds = array<i64: 192, 192>}, {pipeline_mode = #tpu.pipeline_mode<synchronous>, transform_indices = @transform_2, window_bounds = array<i64: 8, 192>}, {transform_indices = @transform_3, window_bounds = array<i64: 8, 1>}]} {
    %c0 = arith.constant 0 : index
    %c0_0 = arith.constant 0 : index
    %0 = vector.load %arg3[%c0, %c0_0] : memref<8x192xf32, #tpu.memory_space<vmem>>, vector<8x192xf32>
    %c0_1 = arith.constant 0 : index
    %c0_2 = arith.constant 0 : index
    %1 = vector.load %arg1[%c0_1, %c0_2] : memref<8x16xf32, #tpu.memory_space<vmem>>, vector<8x16xf32>
    %2 = arith.truncf %1 : vector<8x16xf32> to vector<8x16xbf16>
    %c0_3 = arith.constant 0 : index
    %c0_4 = arith.constant 0 : index
    %3 = vector.load %arg2[%c0_3, %c0_4] : memref<192x192xbf16, #tpu.memory_space<vmem>>, vector<16x192xbf16>
    %4 = vector.extract_strided_slice %0 {offsets = [0, 0], sizes = [1, 192], strides = [1, 1]} : vector<8x192xf32> to vector<1x192xf32>
    %cst = arith.constant dense<0.000000e+00> : vector<8x192xf32>
    %5 = tpu.matmul %2, %3, %cst {dimension_numbers = #tpu.dot_dimension_numbers<[1], [0], [0], [1], [0, 0, 1, 1], [], []>} : vector<8x16xbf16>, vector<16x192xbf16>, vector<8x192xf32> -> vector<8x192xf32>
    %6 = vector.broadcast %4 : vector<1x192xf32> to vector<8x192xf32>
    %7 = arith.addf %5, %6 : vector<8x192xf32>
    %8 = vector.extract_strided_slice %7 {offsets = [0, 0], sizes = [8, 128], strides = [1, 1]} : vector<8x192xf32> to vector<8x128xf32>
    %9 = arith.negf %8 : vector<8x128xf32>
    %10 = math.exp %9 : vector<8x128xf32>
    %cst_5 = arith.constant 1.000000e+00 : f32
    %11 = vector.broadcast %cst_5 : f32 to vector<8x128xf32>
    %12 = arith.addf %11, %10 : vector<8x128xf32>
    %13 = arith.divf %11, %12 : vector<8x128xf32>
    %14 = vector.extract_strided_slice %7 {offsets = [0, 128], sizes = [8, 64], strides = [1, 1]} : vector<8x192xf32> to vector<8x64xf32>
    %15 = math.tanh %14 : vector<8x64xf32>
    %16 = vector.extract_strided_slice %13 {offsets = [0, 0], sizes = [8, 64], strides = [1, 1]} : vector<8x128xf32> to vector<8x64xf32>
    %17 = vector.extract_strided_slice %13 {offsets = [0, 64], sizes = [8, 64], strides = [1, 1]} : vector<8x128xf32> to vector<8x64xf32>
    %18 = arith.mulf %16, %15 : vector<8x64xf32>
    %19 = math.tanh %18 : vector<8x64xf32>
    %20 = arith.mulf %17, %19 : vector<8x64xf32>
    %21 = arith.truncf %20 : vector<8x64xf32> to vector<8x64xbf16>
    %c16 = arith.constant 16 : index
    %c0_6 = arith.constant 0 : index
    %22 = vector.load %arg2[%c16, %c0_6] : memref<192x192xbf16, #tpu.memory_space<vmem>>, vector<64x192xbf16>
    %23 = vector.extract_strided_slice %0 {offsets = [1, 0], sizes = [1, 192], strides = [1, 1]} : vector<8x192xf32> to vector<1x192xf32>
    %cst_7 = arith.constant dense<0.000000e+00> : vector<8x192xf32>
    %24 = tpu.matmul %21, %22, %cst_7 {dimension_numbers = #tpu.dot_dimension_numbers<[1], [0], [0], [1], [0, 0, 1, 1], [], []>} : vector<8x64xbf16>, vector<64x192xbf16>, vector<8x192xf32> -> vector<8x192xf32>
    %25 = vector.broadcast %23 : vector<1x192xf32> to vector<8x192xf32>
    %26 = arith.addf %24, %25 : vector<8x192xf32>
    %27 = vector.extract_strided_slice %26 {offsets = [0, 0], sizes = [8, 128], strides = [1, 1]} : vector<8x192xf32> to vector<8x128xf32>
    %28 = arith.negf %27 : vector<8x128xf32>
    %29 = math.exp %28 : vector<8x128xf32>
    %cst_8 = arith.constant 1.000000e+00 : f32
    %30 = vector.broadcast %cst_8 : f32 to vector<8x128xf32>
    %31 = arith.addf %30, %29 : vector<8x128xf32>
    %32 = arith.divf %30, %31 : vector<8x128xf32>
    %33 = vector.extract_strided_slice %26 {offsets = [0, 128], sizes = [8, 64], strides = [1, 1]} : vector<8x192xf32> to vector<8x64xf32>
    %34 = math.tanh %33 : vector<8x64xf32>
    %35 = vector.extract_strided_slice %32 {offsets = [0, 0], sizes = [8, 64], strides = [1, 1]} : vector<8x128xf32> to vector<8x64xf32>
    %36 = vector.extract_strided_slice %32 {offsets = [0, 64], sizes = [8, 64], strides = [1, 1]} : vector<8x128xf32> to vector<8x64xf32>
    %37 = arith.mulf %35, %34 : vector<8x64xf32>
    %38 = math.tanh %37 : vector<8x64xf32>
    %39 = arith.mulf %36, %38 : vector<8x64xf32>
    %40 = arith.truncf %39 : vector<8x64xf32> to vector<8x64xbf16>
    %c80 = arith.constant 80 : index
    %c0_9 = arith.constant 0 : index
    %41 = vector.load %arg2[%c80, %c0_9] : memref<192x192xbf16, #tpu.memory_space<vmem>>, vector<64x32xbf16>
    %cst_10 = arith.constant dense<0.000000e+00> : vector<8x32xf32>
    %42 = tpu.matmul %40, %41, %cst_10 {dimension_numbers = #tpu.dot_dimension_numbers<[1], [0], [0], [1], [0, 0, 1, 1], [], []>} : vector<8x64xbf16>, vector<64x32xbf16>, vector<8x32xf32> -> vector<8x32xf32>
    %43 = vector.extract_strided_slice %0 {offsets = [2, 0], sizes = [1, 32], strides = [1, 1]} : vector<8x192xf32> to vector<1x32xf32>
    %44 = vector.broadcast %43 : vector<1x32xf32> to vector<8x32xf32>
    %45 = arith.addf %42, %44 : vector<8x32xf32>
    %46 = arith.negf %45 : vector<8x32xf32>
    %47 = math.exp %46 : vector<8x32xf32>
    %cst_11 = arith.constant 1.000000e+00 : f32
    %48 = vector.broadcast %cst_11 : f32 to vector<8x32xf32>
    %49 = arith.addf %48, %47 : vector<8x32xf32>
    %50 = arith.divf %48, %49 : vector<8x32xf32>
    %51 = arith.mulf %45, %50 : vector<8x32xf32>
    %52 = arith.truncf %51 : vector<8x32xf32> to vector<8x32xbf16>
    %c144 = arith.constant 144 : index
    %c0_12 = arith.constant 0 : index
    %53 = vector.load %arg2[%c144, %c0_12] : memref<192x192xbf16, #tpu.memory_space<vmem>>, vector<32x16xbf16>
    %cst_13 = arith.constant dense<0.000000e+00> : vector<8x16xf32>
    %54 = tpu.matmul %52, %53, %cst_13 {dimension_numbers = #tpu.dot_dimension_numbers<[1], [0], [0], [1], [0, 0, 1, 1], [], []>} : vector<8x32xbf16>, vector<32x16xbf16>, vector<8x16xf32> -> vector<8x16xf32>
    %55 = vector.extract_strided_slice %0 {offsets = [3, 0], sizes = [1, 16], strides = [1, 1]} : vector<8x192xf32> to vector<1x16xf32>
    %56 = vector.broadcast %55 : vector<1x16xf32> to vector<8x16xf32>
    %57 = arith.addf %54, %56 : vector<8x16xf32>
    %58 = arith.negf %57 : vector<8x16xf32>
    %59 = math.exp %58 : vector<8x16xf32>
    %cst_14 = arith.constant 1.000000e+00 : f32
    %60 = vector.broadcast %cst_14 : f32 to vector<8x16xf32>
    %61 = arith.addf %60, %59 : vector<8x16xf32>
    %62 = arith.divf %60, %61 : vector<8x16xf32>
    %63 = arith.mulf %57, %62 : vector<8x16xf32>
    %64 = arith.truncf %63 : vector<8x16xf32> to vector<8x16xbf16>
    %c176 = arith.constant 176 : index
    %c0_15 = arith.constant 0 : index
    %65 = vector.load %arg2[%c176, %c0_15] : memref<192x192xbf16, #tpu.memory_space<vmem>>, vector<16x1xbf16>
    %cst_16 = arith.constant dense<0.000000e+00> : vector<8x1xf32>
    %66 = tpu.matmul %64, %65, %cst_16 {dimension_numbers = #tpu.dot_dimension_numbers<[1], [0], [0], [1], [0, 0, 1, 1], [], []>} : vector<8x16xbf16>, vector<16x1xbf16>, vector<8x1xf32> -> vector<8x1xf32>
    %67 = vector.extract_strided_slice %0 {offsets = [4, 0], sizes = [1, 1], strides = [1, 1]} : vector<8x192xf32> to vector<1x1xf32>
    %68 = vector.broadcast %67 : vector<1x1xf32> to vector<8x1xf32>
    %69 = arith.addf %66, %68 : vector<8x1xf32>
    %c0_17 = arith.constant 0 : index
    %c0_18 = arith.constant 0 : index
    %70 = vector.load %arg4[%c0_17, %c0_18] : memref<8x1xf32, #tpu.memory_space<vmem>>, vector<8x1xf32>
    tpu.vector_store %arg4[%c0_17, %c0_18], %69 {strides = array<i32>} : memref<8x1xf32, #tpu.memory_space<vmem>>, vector<8x1xf32>,
    return
  }
  func.func @transform_0(%arg0: i32) -> (i32, i32) {
    %c0_i32 = arith.constant 0 : i32
    %c0_i32_0 = arith.constant 0 : i32
    return %arg0, %c0_i32 : i32, i32
  }
  func.func @transform_1(%arg0: i32) -> (i32, i32) {
    %c0_i32 = arith.constant 0 : i32
    %c0_i32_0 = arith.constant 0 : i32
    %c0_i32_1 = arith.constant 0 : i32
    return %c0_i32, %c0_i32_0 : i32, i32
  }
  func.func @transform_2(%arg0: i32) -> (i32, i32) {
    %c0_i32 = arith.constant 0 : i32
    %c0_i32_0 = arith.constant 0 : i32
    %c0_i32_1 = arith.constant 0 : i32
    return %c0_i32, %c0_i32_0 : i32, i32
  }
  func.func @transform_3(%arg0: i32) -> (i32, i32) {
    %c0_i32 = arith.constant 0 : i32
    %c0_i32_0 = arith.constant 0 : i32
    return %arg0, %c0_i32 : i32, i32
  }
}

</mosaic_0001>

<llo_original>
// kernel: tpu_custom_call.1
$region0: #{tpu_custom_call.1}
  #allocation0 [shape = 'u32[]', space=smem, size = 0x4, offset = 0x4, fixed_abs, tag = 'smem constant byte address 0x4 - core index']
  #allocation1 [shape = 'u32[144,128]{1,0:T(1,128)}', space=vmem, size = 0x12000, scoped, tag = 'internal scratch']
  %s0 = inlined_call_operand.hbm [shape: f32[8,16], index: 0, kind: input, shape index: {}]
  %s1 = inlined_call_operand.hbm [shape: bf16[192,192], index: 1, kind: input, shape index: {}]
  %s2 = inlined_call_operand.hbm [shape: f32[8,192], index: 2, kind: input, shape index: {}]
  %s3 = inlined_call_operand.vmem [shape: f32[8,1], index: 3, kind: output, shape index: {}]
  %s4 = sld [smem:[#allocation0]]
  $region34: #{tpu_custom_call.1} parent=0
    _
  %s6 = ssub.s32 1, %s4
  %s7 = scalar_select 0, %s6, %s4
  $region1: #{tpu_custom_call.1} parent=0
    #allocation2 [shape = 'u8[4096]{0}', space=vmem, size = 0x1000, scoped, tag = 'input window, operand 0, single buffered']
    #allocation3 [shape = 's32[1]{0}', space=sflag, size = 0x4, scoped, tag = 'scoped memory for tpu_custom_call.1']
    #allocation4 [shape = 'u8[98304]{0}', space=vmem, size = 0x18000, scoped, tag = 'input window, operand 1, single buffered']
    #allocation5 [shape = 's32[1]{0}', space=sflag, size = 0x4, scoped, tag = 'scoped memory for tpu_custom_call.1']
    #allocation6 [shape = 'u8[8192]{0}', space=vmem, size = 0x2000, scoped, tag = 'input window, operand 2, single buffered']
    %8 = vsyncpa [#allocation3], 0
    %9 = vsyncpa [#allocation5], 0
    // Predicated region
    $region2: #{tpu_custom_call.1} parent=1 // pred_check
      _
    $region3: #{tpu_custom_call.1} parent=1 // pred_check_branch
      %11 = sbr.rel (0) target = $region5
    $region4: #{tpu_custom_call.1} parent=1 // pred_region
      %s13 = ssub.s32 128, 128
      %14 = vsyncadd [#allocation3], %s13
      %s16 = sshll.u32 [#allocation2], 4
      %s17 = int_to_ptr.vmem [resolvable:$true] %s16
      %19 = dma.hbm_to_vmem [thread:$0]  %s0, 128, %s17, [#allocation3]
    $region5: #{tpu_custom_call.1} parent=1 // pred_fallthru
      _
    // Predicated region
    $region6: #{tpu_custom_call.1} parent=1 // pred_check
      _
    $region7: #{tpu_custom_call.1} parent=1 // pred_check_branch
      %21 = sbr.rel (0) target = $region9
    $region8: #{tpu_custom_call.1} parent=1 // pred_region
      %s23 = ssub.s32 3072, 3072
      %24 = vsyncadd [#allocation5], %s23
      %s25 = sshll.u32 [#allocation4], 4
      %s26 = int_to_ptr.vmem [resolvable:$true] %s25
      %31 = dma.hbm_to_vmem [thread:$0]  %s1, 3072, %s26, [#allocation5], 128, 128, 8
    $region9: #{tpu_custom_call.1} parent=1 // pred_fallthru
      _
    // Predicated region
    $region10: #{tpu_custom_call.1} parent=1 // pred_check
      _
    $region11: #{tpu_custom_call.1} parent=1 // pred_check_branch
      %33 = sbr.rel (0) target = $region13
    $region12: #{tpu_custom_call.1} parent=1 // pred_region
      %s35 = ssub.s32 256, 256
      %36 = vsyncadd [#allocation5], %s35
      %s38 = sshll.u32 [#allocation6], 4
      %s39 = int_to_ptr.vmem [resolvable:$true] %s38
      %41 = dma.hbm_to_vmem [thread:$0]  %s2, 256, %s39, [#allocation5]
    $region13: #{tpu_custom_call.1} parent=1 // pred_fallthru
      _
    // Predicated region
    $region14: #{tpu_custom_call.1} parent=1 // pred_check
      _
    $region15: #{tpu_custom_call.1} parent=1 // pred_check_branch
      %43 = sbr.rel (0) target = $region17
    $region16: #{tpu_custom_call.1} parent=1 // pred_region
      %44 = dma.done [#allocation3], 128
    $region17: #{tpu_custom_call.1} parent=1 // pred_fallthru
      _
    // Predicated region
    $region18: #{tpu_custom_call.1} parent=1 // pred_check
      _
    $region19: #{tpu_custom_call.1} parent=1 // pred_check_branch
      %46 = sbr.rel (0) target = $region21
    $region20: #{tpu_custom_call.1} parent=1 // pred_region
      %47 = dma.done [#allocation5], 3072
    $region21: #{tpu_custom_call.1} parent=1 // pred_fallthru
      _
    // Predicated region
    $region22: #{tpu_custom_call.1} parent=1 // pred_check
      _
    $region23: #{tpu_custom_call.1} parent=1 // pred_check_branch
      %49 = sbr.rel (0) target = $region25
    $region24: #{tpu_custom_call.1} parent=1 // pred_region
      %50 = dma.done [#allocation5], 256
    $region25: #{tpu_custom_call.1} parent=1 // pred_fallthru
      _
    %v52 = vld [vmem:[#allocation6] sm:$0xff]
    %v53 = vld [vmem:[#allocation6 + $0x8] sm:$0xff]
    %v54 = vld [vmem:[#allocation2] sm:$0xff]
    %v55 = vpack.c.bf16 %v54, %v54
    %v56 = vld [vmem:[#allocation4] sm:$0xff]
    %v57 = vld [vmem:[#allocation4 + $0x8] sm:$0xff]
    %v58 = vlaneseq
    %v59 = vshrl.u32 %v58, 7
    %v60 = vsub.s32 0, %v59
    %v61 = vrot.slane %v52, %v60
    %v62 = vlaneseq
    %v63 = vshrl.u32 %v62, 7
    %v64 = vsub.s32 0, %v63
    %v65 = vrot.slane %v53, %v64
    %v68 = vunpack.c.l.b16 %v56
    %v69 = vunpack.c.h.b16 %v56
    %v70 = vunpack.c.l.b16 %v57
    %v71 = vunpack.c.h.b16 %v57
    %v72 = vpack.c.b16 %v70, %v68
    %v73 = vpack.c.b16 %v71, %v69
    %vm76 = vcmask 130048
    %v78 = vsel %vm76, %v55, 0
    %80 = vmatprep.subr.bf16.mxu0 %v73
    %81 = vmatpush1.bf16.msra.mxu0 %v72
    %82 = vmatprep.subr.bf16.mxu0 0
    %83 = vmatpush1.bf16.msra.mxu0 0
    %84 = vmatprep.subr.bf16.mxu0 0
    %85 = vmatpush1.bf16.msra.mxu0 0
    %86 = vmatprep.subr.bf16.mxu0 0
    %87 = vmatpush1.bf16.msra.mxu0 0
    %88 = vmatprep.subr.bf16.mxu0 0
    %89 = vmatpush1.bf16.msra.mxu0 0
    %90 = vmatprep.subr.bf16.mxu0 0
    %91 = vmatpush1.bf16.msra.mxu0 0
    %92 = vmatprep.subr.bf16.mxu0 0
    %93 = vmatpush1.bf16.msra.mxu0 0
    %94 = vmatprep.subr.bf16.mxu0 0
    %95 = vmatpush1.bf16.msra.mxu0 0
    %96 = vmatprep.subr.bf16.mxu0 0
    %97 = vmatpush1.bf16.msra.mxu0 0
    %98 = vmatprep.subr.bf16.mxu0 0
    %99 = vmatpush1.bf16.msra.mxu0 0
    %100 = vmatprep.subr.bf16.mxu0 0
    %101 = vmatpush1.bf16.msra.mxu0 0
    %102 = vmatprep.subr.bf16.mxu0 0
    %103 = vmatpush1.bf16.msra.mxu0 0
    %104 = vmatprep.subr.bf16.mxu0 0
    %105 = vmatpush1.bf16.msra.mxu0 0
    %106 = vmatprep.subr.bf16.mxu0 0
    %107 = vmatpush1.bf16.msra.mxu0 0
    %108 = vmatprep.subr.bf16.mxu0 0
    %109 = vmatpush1.bf16.msra.mxu0 0
    %110 = vmatprep.subr.bf16.mxu0 0
    %111 = vmatpush1.bf16.msra.mxu0 0
    %112 = vmatprep.mubr.bf16.mxu0 0
    %113 = vmatmul.mubr.bf16.gmra.mrb[0].mxu0 %v78
    %v114 = vpop.f32.mrb[0].mxu0
    %v115 = vadd.f32 %v61, %v114
    %v116 = vpop.f32.mrb[0].mxu0
    %v117 = vadd.f32 %v65, %v116
    %v118 = vpop.f32.mrb[0].mxu0
    %v119 = vpop.f32.mrb[0].mxu0
    %120 = vdwg.mxu0
    %v121 = vxor.u32 %v115, 2147483648
    %v122 = vmul.f32 %v121, 1.442695
    %v123 = vpow.pop %v122
    %v124 = vadd.f32 %v123, 1.0
    %v125 = vrcp.pop %v124
    %v126 = vmul.f32 1.0, %v125
    %v127 = vtanh.pop %v117
    %v128 = vmul.f32 %v126, %v127
    %v129 = vtanh.pop %v128
    %131 = vrot.lane.b32.xlu0 %v129, 64
    %v132 = vpop.permute.xlu0 %131
    %v134 = vmul.f32 %v126, %v132
    %v135 = vpack.c.bf16 %v134, %v134
    %v136 = vld [vmem:[#allocation4 + $0x10] sm:$0xff]
    %v137 = vld [vmem:[#allocation4 + $0x18] sm:$0xff]
    %v138 = vld [vmem:[#allocation4 + $0x20] sm:$0xff]
    %v139 = vld [vmem:[#allocation4 + $0x28] sm:$0xff]
    %v140 = vld [vmem:[#allocation4 + $0x30] sm:$0xff]
    %v141 = vld [vmem:[#allocation4 + $0x38] sm:$0xff]
    %v142 = vld [vmem:[#allocation4 + $0x40] sm:$0xff]
    %v143 = vld [vmem:[#allocation4 + $0x48] sm:$0xff]
    %v144 = vlaneseq
    %v145 = vshrl.u32 %v144, 7
    %v146 = vsub.s32 1, %v145
    %v147 = vrot.slane %v52, %v146
    %v148 = vlaneseq
    %v149 = vshrl.u32 %v148, 7
    %v150 = vsub.s32 1, %v149
    %v151 = vrot.slane %v53, %v150
    %153 = vrot.lane.b32.xlu0 %v135, 64
    %v154 = vpop.permute.xlu0 %153
    %v163 = vunpack.c.l.b16 %v136
    %v164 = vunpack.c.h.b16 %v136
    %v165 = vunpack.c.l.b16 %v137
    %v166 = vunpack.c.h.b16 %v137
    %v167 = vunpack.c.l.b16 %v138
    %v168 = vunpack.c.h.b16 %v138
    %v169 = vunpack.c.l.b16 %v139
    %v170 = vunpack.c.h.b16 %v139
    %v171 = vunpack.c.l.b16 %v140
    %v172 = vunpack.c.h.b16 %v140
    %v173 = vunpack.c.l.b16 %v141
    %v174 = vunpack.c.h.b16 %v141
    %v175 = vunpack.c.l.b16 %v142
    %v176 = vunpack.c.h.b16 %v142
    %v177 = vunpack.c.l.b16 %v143
    %v178 = vunpack.c.h.b16 %v143
    %v179 = vpack.c.b16 %v165, %v163
    %v180 = vpack.c.b16 %v166, %v164
    %v181 = vpack.c.b16 %v169, %v167
    %v182 = vpack.c.b16 %v170, %v168
    %v183 = vpack.c.b16 %v173, %v171
    %v184 = vpack.c.b16 %v174, %v172
    %v185 = vpack.c.b16 %v177, %v175
    %v186 = vpack.c.b16 %v178, %v176
    %vm195 = vcmask 523264
    %v197 = vsel %vm195, %v154, 0
    %199 = vmatprep.subr.bf16.mxu0 %v180
    %200 = vmatpush1.bf16.msra.mxu0 %v179
    %201 = vmatprep.subr.bf16.mxu0 %v182
    %202 = vmatpush1.bf16.msra.mxu0 %v181
    %203 = vmatprep.subr.bf16.mxu0 %v184
    %204 = vmatpush1.bf16.msra.mxu0 %v183
    %205 = vmatprep.subr.bf16.mxu0 %v186
    %206 = vmatpush1.bf16.msra.mxu0 %v185
    %207 = vmatprep.subr.bf16.mxu0 0
    %208 = vmatpush1.bf16.msra.mxu0 0
    %209 = vmatprep.subr.bf16.mxu0 0
    %210 = vmatpush1.bf16.msra.mxu0 0
    %211 = vmatprep.subr.bf16.mxu0 0
    %212 = vmatpush1.bf16.msra.mxu0 0
    %213 = vmatprep.subr.bf16.mxu0 0
    %214 = vmatpush1.bf16.msra.mxu0 0
    %215 = vmatprep.subr.bf16.mxu0 0
    %216 = vmatpush1.bf16.msra.mxu0 0
    %217 = vmatprep.subr.bf16.mxu0 0
    %218 = vmatpush1.bf16.msra.mxu0 0
    %219 = vmatprep.subr.bf16.mxu0 0
    %220 = vmatpush1.bf16.msra.mxu0 0
    %221 = vmatprep.subr.bf16.mxu0 0
    %222 = vmatpush1.bf16.msra.mxu0 0
    %223 = vmatprep.subr.bf16.mxu0 0
    %224 = vmatpush1.bf16.msra.mxu0 0
    %225 = vmatprep.subr.bf16.mxu0 0
    %226 = vmatpush1.bf16.msra.mxu0 0
    %227 = vmatprep.subr.bf16.mxu0 0
    %228 = vmatpush1.bf16.msra.mxu0 0
    %229 = vmatprep.subr.bf16.mxu0 0
    %230 = vmatpush1.bf16.msra.mxu0 0
    %231 = vmatprep.mubr.bf16.mxu0 0
    %232 = vmatmul.mubr.bf16.gmra.mrb[0].mxu0 %v197
    %v233 = vpop.f32.mrb[0].mxu0
    %v234 = vadd.f32 %v147, %v233
    %v235 = vpop.f32.mrb[0].mxu0
    %v236 = vadd.f32 %v151, %v235
    %v237 = vpop.f32.mrb[0].mxu0
    %v238 = vpop.f32.mrb[0].mxu0
    %239 = vdwg.mxu0
    %v240 = vxor.u32 %v234, 2147483648
    %v241 = vmul.f32 %v240, 1.442695
    %v242 = vpow.pop %v241
    %v243 = vadd.f32 %v242, 1.0
    %v244 = vrcp.pop %v243
    %v245 = vmul.f32 1.0, %v244
    %v246 = vtanh.pop %v236
    %v247 = vmul.f32 %v245, %v246
    %v248 = vtanh.pop %v247
    %250 = vrot.lane.b32.xlu0 %v248, 64
    %v251 = vpop.permute.xlu0 %250
    %v253 = vmul.f32 %v245, %v251
    %v254 = vpack.c.bf16 %v253, %v253
    %v255 = vld [vmem:[#allocation4 + $0x50] sm:$0xf]
    %v256 = vld [vmem:[#allocation4 + $0x58] sm:$0xf]
    %v257 = vld [vmem:[#allocation4 + $0x60] sm:$0xf]
    %v258 = vld [vmem:[#allocation4 + $0x68] sm:$0xf]
    %v259 = vld [vmem:[#allocation4 + $0x70] sm:$0xf]
    %v260 = vld [vmem:[#allocation4 + $0x78] sm:$0xf]
    %v261 = vld [vmem:[#allocation4 + $0x80] sm:$0xf]
    %v262 = vld [vmem:[#allocation4 + $0x88] sm:$0xf]
    %v263 = vlaneseq
    %v264 = vshrl.u32 %v263, 7
    %v265 = vsub.s32 2, %v264
    %v266 = vrot.slane %v52, %v265
    %268 = vrot.lane.b32.xlu0 %v254, 64
    %v269 = vpop.permute.xlu0 %268
    %v278 = vunpack.c.l.b16 %v255
    %v279 = vunpack.c.l.b16 %v256
    %v280 = vunpack.c.l.b16 %v257
    %v281 = vunpack.c.l.b16 %v258
    %v282 = vunpack.c.l.b16 %v259
    %v283 = vunpack.c.l.b16 %v260
    %v284 = vunpack.c.l.b16 %v261
    %v285 = vunpack.c.l.b16 %v262
    %v286 = vpack.c.b16 %v279, %v278
    %v287 = vpack.c.b16 %v281, %v280
    %v288 = vpack.c.b16 %v283, %v282
    %v289 = vpack.c.b16 %v285, %v284
    %v295 = vsel %vm195, %v269, 0
    %297 = vmatprep.subr.bf16.mxu0 0
    %298 = vmatpush1.bf16.msra.mxu0 %v286
    %299 = vmatprep.subr.bf16.mxu0 0
    %300 = vmatpush1.bf16.msra.mxu0 %v287
    %301 = vmatprep.subr.bf16.mxu0 0
    %302 = vmatpush1.bf16.msra.mxu0 %v288
    %303 = vmatprep.subr.bf16.mxu0 0
    %304 = vmatpush1.bf16.msra.mxu0 %v289
    %305 = vmatprep.subr.bf16.mxu0 0
    %306 = vmatpush1.bf16.msra.mxu0 0
    %307 = vmatprep.subr.bf16.mxu0 0
    %308 = vmatpush1.bf16.msra.mxu0 0
    %309 = vmatprep.subr.bf16.mxu0 0
    %310 = vmatpush1.bf16.msra.mxu0 0
    %311 = vmatprep.subr.bf16.mxu0 0
    %312 = vmatpush1.bf16.msra.mxu0 0
    %313 = vmatprep.subr.bf16.mxu0 0
    %314 = vmatpush1.bf16.msra.mxu0 0
    %315 = vmatprep.subr.bf16.mxu0 0
    %316 = vmatpush1.bf16.msra.mxu0 0
    %317 = vmatprep.subr.bf16.mxu0 0
    %318 = vmatpush1.bf16.msra.mxu0 0
    %319 = vmatprep.subr.bf16.mxu0 0
    %320 = vmatpush1.bf16.msra.mxu0 0
    %321 = vmatprep.subr.bf16.mxu0 0
    %322 = vmatpush1.bf16.msra.mxu0 0
    %323 = vmatprep.subr.bf16.mxu0 0
    %324 = vmatpush1.bf16.msra.mxu0 0
    %325 = vmatprep.subr.bf16.mxu0 0
    %326 = vmatpush1.bf16.msra.mxu0 0
    %327 = vmatprep.subr.bf16.mxu0 0
    %328 = vmatpush1.bf16.msra.mxu0 0
    %329 = vmatprep.mubr.bf16.mxu0 0
    %330 = vmatmul.mubr.bf16.gmra.mrb[0].mxu0 %v295
    %v331 = vpop.f32.mrb[0].mxu0
    %v332 = vadd.f32 %v266, %v331
    %v333 = vpop.f32.mrb[0].mxu0
    %v334 = vpop.f32.mrb[0].mxu0
    %v335 = vpop.f32.mrb[0].mxu0
    %336 = vdwg.mxu0
    %v337 = vxor.u32 %v332, 2147483648
    %v338 = vmul.f32 %v337, 1.442695
    %v339 = vpow.pop %v338
    %v340 = vadd.f32 %v339, 1.0
    %v341 = vrcp.pop %v340
    %v342 = vmul.f32 1.0, %v341
    %v343 = vmul.f32 %v332, %v342
    %v344 = vpack.c.bf16 %v343, %v343
    %v345 = vld [vmem:[#allocation4 + $0x90] sm:$0xf]
    %v346 = vld [vmem:[#allocation4 + $0x98] sm:$0xf]
    %v347 = vld [vmem:[#allocation4 + $0xa0] sm:$0xf]
    %v348 = vld [vmem:[#allocation4 + $0xa8] sm:$0xf]
    %v349 = vlaneseq
    %v350 = vshrl.u32 %v349, 7
    %v351 = vsub.s32 3, %v350
    %v352 = vrot.slane %v52, %v351
    %v357 = vunpack.c.l.b16 %v345
    %v358 = vunpack.c.l.b16 %v346
    %v359 = vunpack.c.l.b16 %v347
    %v360 = vunpack.c.l.b16 %v348
    %v361 = vpack.c.b16 %v358, %v357
    %v362 = vpack.c.b16 %v360, %v359
    %vm365 = vcmask 261120
    %v367 = vsel %vm365, %v344, 0
    %369 = vmatprep.subr.bf16.mxu0 0
    %370 = vmatpush1.bf16.msra.mxu0 %v361
    %371 = vmatprep.subr.bf16.mxu0 0
    %372 = vmatpush1.bf16.msra.mxu0 %v362
    %373 = vmatprep.subr.bf16.mxu0 0
    %374 = vmatpush1.bf16.msra.mxu0 0
    %375 = vmatprep.subr.bf16.mxu0 0
    %376 = vmatpush1.bf16.msra.mxu0 0
    %377 = vmatprep.subr.bf16.mxu0 0
    %378 = vmatpush1.bf16.msra.mxu0 0
    %379 = vmatprep.subr.bf16.mxu0 0
    %380 = vmatpush1.bf16.msra.mxu0 0
    %381 = vmatprep.subr.bf16.mxu0 0
    %382 = vmatpush1.bf16.msra.mxu0 0
    %383 = vmatprep.subr.bf16.mxu0 0
    %384 = vmatpush1.bf16.msra.mxu0 0
    %385 = vmatprep.subr.bf16.mxu0 0
    %386 = vmatpush1.bf16.msra.mxu0 0
    %387 = vmatprep.subr.bf16.mxu0 0
    %388 = vmatpush1.bf16.msra.mxu0 0
    %389 = vmatprep.subr.bf16.mxu0 0
    %390 = vmatpush1.bf16.msra.mxu0 0
    %391 = vmatprep.subr.bf16.mxu0 0
    %392 = vmatpush1.bf16.msra.mxu0 0
    %393 = vmatprep.subr.bf16.mxu0 0
    %394 = vmatpush1.bf16.msra.mxu0 0
    %395 = vmatprep.subr.bf16.mxu0 0
    %396 = vmatpush1.bf16.msra.mxu0 0
    %397 = vmatprep.subr.bf16.mxu0 0
    %398 = vmatpush1.bf16.msra.mxu0 0
    %399 = vmatprep.subr.bf16.mxu0 0
    %400 = vmatpush1.bf16.msra.mxu0 0
    %401 = vmatprep.mubr.bf16.mxu0 0
    %402 = vmatmul.mubr.bf16.gmra.mrb[0].mxu0 %v367
    %v403 = vpop.f32.mrb[0].mxu0
    %v404 = vadd.f32 %v352, %v403
    %v405 = vpop.f32.mrb[0].mxu0
    %v406 = vpop.f32.mrb[0].mxu0
    %v407 = vpop.f32.mrb[0].mxu0
    %408 = vdwg.mxu0
    %v409 = vxor.u32 %v404, 2147483648
    %v410 = vmul.f32 %v409, 1.442695
    %v411 = vpow.pop %v410
    %v412 = vadd.f32 %v411, 1.0
    %v413 = vrcp.pop %v412
    %v414 = vmul.f32 1.0, %v413
    %v415 = vmul.f32 %v404, %v414
    %v416 = vpack.c.bf16 %v415, %v415
    %v417 = vld [vmem:[#allocation4 + $0xb0] sm:$0xf]
    %v418 = vld [vmem:[#allocation4 + $0xb8] sm:$0xf]
    %v419 = vlaneseq
    %v420 = vshrl.u32 %v419, 7
    %v421 = vsub.s32 4, %v420
    %v422 = vrot.slane %v52, %v421
    %v425 = vunpack.c.l.b16 %v417
    %v426 = vunpack.c.l.b16 %v418
    %v427 = vpack.c.b16 %v426, %v425
    %v430 = vsel %vm76, %v416, 0
    %432 = vmatprep.subr.bf16.mxu0 0
    %433 = vmatpush1.bf16.msra.mxu0 %v427
    %434 = vmatprep.subr.bf16.mxu0 0
    %435 = vmatpush1.bf16.msra.mxu0 0
    %436 = vmatprep.subr.bf16.mxu0 0
    %437 = vmatpush1.bf16.msra.mxu0 0
    %438 = vmatprep.subr.bf16.mxu0 0
    %439 = vmatpush1.bf16.msra.mxu0 0
    %440 = vmatprep.subr.bf16.mxu0 0
    %441 = vmatpush1.bf16.msra.mxu0 0
    %442 = vmatprep.subr.bf16.mxu0 0
    %443 = vmatpush1.bf16.msra.mxu0 0
    %444 = vmatprep.subr.bf16.mxu0 0
    %445 = vmatpush1.bf16.msra.mxu0 0
    %446 = vmatprep.subr.bf16.mxu0 0
    %447 = vmatpush1.bf16.msra.mxu0 0
    %448 = vmatprep.subr.bf16.mxu0 0
    %449 = vmatpush1.bf16.msra.mxu0 0
    %450 = vmatprep.subr.bf16.mxu0 0
    %451 = vmatpush1.bf16.msra.mxu0 0
    %452 = vmatprep.subr.bf16.mxu0 0
    %453 = vmatpush1.bf16.msra.mxu0 0
    %454 = vmatprep.subr.bf16.mxu0 0
    %455 = vmatpush1.bf16.msra.mxu0 0
    %456 = vmatprep.subr.bf16.mxu0 0
    %457 = vmatpush1.bf16.msra.mxu0 0
    %458 = vmatprep.subr.bf16.mxu0 0
    %459 = vmatpush1.bf16.msra.mxu0 0
    %460 = vmatprep.subr.bf16.mxu0 0
    %461 = vmatpush1.bf16.msra.mxu0 0
    %462 = vmatprep.subr.bf16.mxu0 0
    %463 = vmatpush1.bf16.msra.mxu0 0
    %464 = vmatprep.mubr.bf16.mxu0 0
    %465 = vmatmul.mubr.bf16.gmra.mrb[0].mxu0 %v430
    %v466 = vpop.f32.mrb[0].mxu0
    %v467 = vadd.f32 %v422, %v466
    %v468 = vpop.f32.mrb[0].mxu0
    %v469 = vpop.f32.mrb[0].mxu0
    %v470 = vpop.f32.mrb[0].mxu0
    %471 = vdwg.mxu0
    %vm472 = vcmask 7168
    %473 = vst.msk [vmem:[%s3] sm:$0xff] %vm472, %v467
    // Predicated region
    $region26: #{tpu_custom_call.1} parent=1 // pred_check
      _
    $region27: #{tpu_custom_call.1} parent=1 // pred_check_branch
      %475 = sbr.rel (0) target = $region29
    $region28: #{tpu_custom_call.1} parent=1 // pred_region
      _
    $region29: #{tpu_custom_call.1} parent=1 // pred_fallthru
      _
    // Predicated region
    $region30: #{tpu_custom_call.1} parent=1 // pred_check
      _
    $region31: #{tpu_custom_call.1} parent=1 // pred_check_branch
      %477 = sbr.rel (0) target = $region33
    $region32: #{tpu_custom_call.1} parent=1 // pred_region
      _
    $region33: #{tpu_custom_call.1} parent=1 // pred_fallthru
      _
    %478 = vsyncpa [#allocation3], 1
    %479 = vsyncpa [#allocation5], 1

</llo_original>
